<compile_context>
chip_gen: v6e
topology: v6e:2x2x1
jax: 0.10.0
libtpu: 0.0.40
codegen_flags: <defaults>
</compile_context>

<pallas_src>
import functools

import jax
import jax.numpy as jnp
from jax.experimental import pallas as pl
from jax.experimental.pallas import tpu as pltpu


def _pick_batch_block(B, L):
    """Batch rows per grid step.

    Targets ~256 MXU M-rows per matmul (v6e/v7x; v5e saturates at 128), keeps
    at least 2 grid steps so both TensorCores get work, and only merges batch
    rows when L is sublane-aligned (so the (B_blk, L, C) <-> (B_blk*L, C)
    reshapes are trivial relayouts).
    """
    if L % 8 != 0:
        return 1
    cap = max(1, 256 // max(L, 1))
    if B >= 2:
        cap = min(cap, B // 2)          # keep >= 2 parallel grid steps
    cap = max(1, min(cap, B))
    for d in range(cap, 0, -1):         # largest divisor of B that fits
        if B % d == 0:
            return d
    return 1


def _sepconv_block_kernel(x_ref, w1d_ref, w1p_ref, b1p_ref,
                          w2d_ref, w2p_ref, b2p_ref,
                          o_ref, s1_ref, s2_ref, *, B_blk, L, K, pool):
    f32 = jnp.float32
    pad_l = (K - 1) // 2
    pad_r = (K - 1) - pad_l
    Lp = L + K - 1
    L_out = L // pool

    C_in = w1d_ref.shape[1]
    C_out = w2d_ref.shape[1]

    # Zero only the (K-1) halo rows of the padded staging buffers.  The
    # interior rows are fully overwritten every step; re-zero each step so the
    # kernel stays correct when the "parallel" batch axis is split per-core.
    if pad_l:
        s1_ref[:, 0:pad_l, :] = jnp.zeros((B_blk, pad_l, C_in), f32)
        s2_ref[:, 0:pad_l, :] = jnp.zeros((B_blk, pad_l, C_out), f32)
    if pad_r:
        s1_ref[:, pad_l + L:Lp, :] = jnp.zeros((B_blk, pad_r, C_in), f32)
        s2_ref[:, pad_l + L:Lp, :] = jnp.zeros((B_blk, pad_r, C_out), f32)

    # ---- NCL -> NLC inside the kernel (per-sample 2-D transposes) ----------
    x = x_ref[...].astype(f32)                         # (B_blk, C_in, L)
    for b in range(B_blk):
        s1_ref[b, pad_l:pad_l + L, :] = x[b].T         # (L, C_in)

    # ---- SepConv1D #1: depthwise K-tap conv on the VPU ----------------------
    # (depthwise bias folded into the pointwise bias in the wrapper)
    w1d = w1d_ref[...]                                 # (K, C_in)
    acc = s1_ref[:, 0:L, :] * w1d[0:1, :][None]
    for k in range(1, K):
        acc = acc + s1_ref[:, k:k + L, :] * w1d[k:k + 1, :][None]

    # pointwise 1x1 conv: one MXU matmul with M = B_blk*L, fused bias + ReLU.
    # (With tiny C_in this underfills the MXU reduction depth; a VPU-FMA path
    # would also work, but the matmul keeps the code uniform.)
    h = acc.reshape(B_blk * L, C_in)
    h = jnp.dot(h, w1p_ref[...], preferred_element_type=f32)
    h = jnp.maximum(h + b1p_ref[...], 0.0)             # (B_blk*L, C_out)

    # ---- SepConv1D #2 --------------------------------------------------------
    for b in range(B_blk):
        s2_ref[b, pad_l:pad_l + L, :] = h[b * L:(b + 1) * L, :]

    w2d = w2d_ref[...]                                 # (K, C_out)
    acc2 = s2_ref[:, 0:L, :] * w2d[0:1, :][None]
    for k in range(1, K):
        acc2 = acc2 + s2_ref[:, k:k + L, :] * w2d[k:k + 1, :][None]

    h2 = acc2.reshape(B_blk * L, C_out)
    h2 = jnp.dot(h2, w2p_ref[...], preferred_element_type=f32)
    h2 = jnp.maximum(h2 + b2p_ref[...], 0.0)           # (B_blk*L, C_out)

    # ---- MaxPool1d(pool) + NLC -> NCL output store ---------------------------
    # Reuse s2 (h1 no longer needed) as the pre-pool staging buffer and pool
    # with sublane-strided ref reads; store each sample as (C_out, L_out).
    for b in range(B_blk):
        s2_ref[b, pad_l:pad_l + L, :] = h2[b * L:(b + 1) * L, :]
    for b in range(B_blk):
        row = s2_ref.at[b]                             # (Lp, C_out) view
        pooled = row[pl.ds(pad_l, L_out, stride=pool), :]
        for p in range(1, pool):
            pooled = jnp.maximum(
                pooled, row[pl.ds(pad_l + p, L_out, stride=pool), :])
        o_ref[b] = pooled.T.astype(o_ref.dtype)        # (C_out, L_out)


def sepconv_block_forward(x, params, *, kernel_size, pool_size):
    """x: (B, C_in, L) float32 (PyTorch NCL layout) -> (B, C_out, L//pool)."""
    w1d, b1d = params["w1_dw"], params["b1_dw"]   # (C_in, 1, K), (C_in,)
    w1p, b1p = params["w1_pw"], params["b1_pw"]   # (C_out, C_in, 1), (C_out,)
    w2d, b2d = params["w2_dw"], params["b2_dw"]   # (C_out, 1, K), (C_out,)
    w2p, b2p = params["w2_pw"], params["b2_pw"]   # (C_out, C_out, 1), (C_out,)

    C_in = w1d.shape[0]
    C_out = w1p.shape[0]
    K = kernel_size

    # Mirror SepConv1D's exact defensive permute rule for channel-last inputs.
    if x.shape[1] != C_in and x.shape[2] == C_in:
        x = jnp.transpose(x, (0, 2, 1))

    B, _, L = x.shape
    L_out = L // pool_size
    Lp = L + K - 1
    x = x.astype(jnp.float32)

    # One-time (tiny) weight prep: kernel-friendly layouts + folded biases.
    w1d_k = jnp.transpose(w1d[:, 0, :], (1, 0))        # (K, C_in)
    w2d_k = jnp.transpose(w2d[:, 0, :], (1, 0))        # (K, C_out)
    w1p_k = jnp.transpose(w1p[:, :, 0], (1, 0))        # (C_in, C_out)
    w2p_k = jnp.transpose(w2p[:, :, 0], (1, 0))        # (C_out, C_out)
    b1p_eff = (b1p + jnp.dot(b1d, w1p_k)).reshape(1, C_out)
    b2p_eff = (b2p + jnp.dot(b2d, w2p_k)).reshape(1, C_out)

    B_blk = _pick_batch_block(B, L)
    grid = (B // B_blk,)

    kernel = functools.partial(_sepconv_block_kernel,
                               B_blk=B_blk, L=L, K=K, pool=pool_size)

    def const_spec(shape):
        n = len(shape)
        return pl.BlockSpec(shape, lambda b, _n=n: (0,) * _n)

    out = pl.pallas_call(
        kernel,
        out_shape=jax.ShapeDtypeStruct((B, C_out, L_out), jnp.float32),
        grid_spec=pltpu.PrefetchScalarGridSpec(
            num_scalar_prefetch=0,
            grid=grid,
            in_specs=[
                pl.BlockSpec((B_blk, C_in, L), lambda b: (b, 0, 0)),
                const_spec((K, C_in)),
                const_spec((C_in, C_out)),
                const_spec((1, C_out)),
                const_spec((K, C_out)),
                const_spec((C_out, C_out)),
                const_spec((1, C_out)),
            ],
            out_specs=pl.BlockSpec((B_blk, C_out, L_out), lambda b: (b, 0, 0)),
            scratch_shapes=[
                pltpu.VMEM((B_blk, Lp, C_in), jnp.float32),   # padded conv-1 input
                pltpu.VMEM((B_blk, Lp, C_out), jnp.float32),  # padded conv-2 in / pre-pool
            ],
        ),
        compiler_params=pltpu.CompilerParams(
            dimension_semantics=("parallel",),
        ),
    )(x, w1d_k, w1p_k, b1p_eff, w2d_k, w2p_k, b2p_eff)

    return out   # already NCL: (B, C_out, L_out)


def init_sepconv_block_params(key, in_channels, out_channels, kernel_size):
    """PyTorch Conv1d default init: U(-1/sqrt(fan_in), 1/sqrt(fan_in))."""
    ks = jax.random.split(key, 8)

    def conv_init(kw, kb, shape, fan_in):
        bound = float(fan_in) ** -0.5
        w = jax.random.uniform(kw, shape, jnp.float32, -bound, bound)
        b = jax.random.uniform(kb, (shape[0],), jnp.float32, -bound, bound)
        return w, b

    w1_dw, b1_dw = conv_init(ks[0], ks[1], (in_channels, 1, kernel_size), kernel_size)
    w1_pw, b1_pw = conv_init(ks[2], ks[3], (out_channels, in_channels, 1), in_channels)
    w2_dw, b2_dw = conv_init(ks[4], ks[5], (out_channels, 1, kernel_size), kernel_size)
    w2_pw, b2_pw = conv_init(ks[6], ks[7], (out_channels, out_channels, 1), out_channels)
    return dict(w1_dw=w1_dw, b1_dw=b1_dw, w1_pw=w1_pw, b1_pw=b1_pw,
                w2_dw=w2_dw, b2_dw=b2_dw, w2_pw=w2_pw, b2_pw=b2_pw)


def ref_sepconv_block(x, params, *, kernel_size, pool_size):
    """Pure-JAX reference (lax convs) matching the PyTorch module."""
    K = kernel_size
    pad_l = (K - 1) // 2
    pad_r = (K - 1) - pad_l

    def conv1d(h, w, b, *, groups, pad):
        out = jax.lax.conv_general_dilated(
            h, w, window_strides=(1,), padding=[pad],
            dimension_numbers=("NCH", "OIH", "NCH"),
            feature_group_count=groups)
        return out + b[None, :, None]

    h = conv1d(x, params["w1_dw"], params["b1_dw"], groups=x.shape[1], pad=(pad_l, pad_r))
    h = conv1d(h, params["w1_pw"], params["b1_pw"], groups=1, pad=(0, 0))
    h = jax.nn.relu(h)
    h = conv1d(h, params["w2_dw"], params["b2_dw"], groups=h.shape[1], pad=(pad_l, pad_r))
    h = conv1d(h, params["w2_pw"], params["b2_pw"], groups=1, pad=(0, 0))
    h = jax.nn.relu(h)
    B, C, L = h.shape
    Lo = L // pool_size
    return h[:, :, :Lo * pool_size].reshape(B, C, Lo, pool_size).max(axis=-1)


if __name__ == "__main__":
    key = jax.random.PRNGKey(0)
    k_x, k_p = jax.random.split(key)

    batch, in_channels, out_channels = 2, 4, 32
    length, kernel_size, pool_size = 16, 3, 2

    x = jax.random.normal(k_x, (batch, in_channels, length), jnp.float32)
    params = init_sepconv_block_params(k_p, in_channels, out_channels, kernel_size)

    out = sepconv_block_forward(x, params, kernel_size=kernel_size, pool_size=pool_size)
    jax.block_until_ready(out)

    ref = ref_sepconv_block(x, params, kernel_size=kernel_size, pool_size=pool_size)
    assert out.shape == (batch, out_channels, length // pool_size), out.shape
    assert jnp.allclose(out, ref, atol=1e-4, rtol=1e-4), \
        float(jnp.max(jnp.abs(out - ref)))

    print("KERNEL_OK")
</pallas_src>

<mosaic_0001>
module attributes {stable_mosaic.version = 11 : i64} {
  func.func @_sepconv_block_kernel(%arg0: i32, %arg1: memref<1x4x16xf32, #tpu.memory_space<vmem>>, %arg2: memref<3x4xf32, #tpu.memory_space<vmem>>, %arg3: memref<4x32xf32, #tpu.memory_space<vmem>>, %arg4: memref<1x32xf32, #tpu.memory_space<vmem>>, %arg5: memref<3x32xf32, #tpu.memory_space<vmem>>, %arg6: memref<32x32xf32, #tpu.memory_space<vmem>>, %arg7: memref<1x32xf32, #tpu.memory_space<vmem>>, %arg8: memref<1x32x8xf32, #tpu.memory_space<vmem>>, %arg9: memref<1x18x4xf32, #tpu.memory_space<vmem>>, %arg10: memref<1x18x32xf32, #tpu.memory_space<vmem>>) attributes {dimension_semantics = [#tpu.dimension_semantics<parallel>], iteration_bounds = array<i64: 2>, scalar_prefetch = 0 : i64, scratch_operands = 2 : i64, tpu.core_type = #tpu.core_type<tc>, window_params = [{transform_indices = @transform_0, window_bounds = array<i64: 1, 4, 16>}, {pipeline_mode = #tpu.pipeline_mode<synchronous>, transform_indices = @transform_1, window_bounds = array<i64: 3, 4>}, {pipeline_mode = #tpu.pipeline_mode<synchronous>, transform_indices = @transform_2, window_bounds = array<i64: 4, 32>}, {pipeline_mode = #tpu.pipeline_mode<synchronous>, transform_indices = @transform_3, window_bounds = array<i64: 1, 32>}, {pipeline_mode = #tpu.pipeline_mode<synchronous>, transform_indices = @transform_4, window_bounds = array<i64: 3, 32>}, {pipeline_mode = #tpu.pipeline_mode<synchronous>, transform_indices = @transform_5, window_bounds = array<i64: 32, 32>}, {pipeline_mode = #tpu.pipeline_mode<synchronous>, transform_indices = @transform_6, window_bounds = array<i64: 1, 32>}, {transform_indices = @transform_7, window_bounds = array<i64: 1, 32, 8>}]} {
    %cst = arith.constant 0.000000e+00 : f32
    %0 = vector.broadcast %cst : f32 to vector<1x1x4xf32>
    %c0 = arith.constant 0 : index
    %c0_0 = arith.constant 0 : index
    %c0_1 = arith.constant 0 : index
    %1 = vector.load %arg9[%c0, %c0_0, %c0_1] : memref<1x18x4xf32, #tpu.memory_space<vmem>>, vector<1x1x4xf32>
    tpu.vector_store %arg9[%c0, %c0_0, %c0_1], %0 {strides = array<i32>} : memref<1x18x4xf32, #tpu.memory_space<vmem>>, vector<1x1x4xf32>,
    %cst_2 = arith.constant 0.000000e+00 : f32
    %2 = vector.broadcast %cst_2 : f32 to vector<1x1x32xf32>
    %c0_3 = arith.constant 0 : index
    %c0_4 = arith.constant 0 : index
    %c0_5 = arith.constant 0 : index
    %3 = vector.load %arg10[%c0_3, %c0_4, %c0_5] : memref<1x18x32xf32, #tpu.memory_space<vmem>>, vector<1x1x32xf32>
    tpu.vector_store %arg10[%c0_3, %c0_4, %c0_5], %2 {strides = array<i32>} : memref<1x18x32xf32, #tpu.memory_space<vmem>>, vector<1x1x32xf32>,
    %cst_6 = arith.constant 0.000000e+00 : f32
    %4 = vector.broadcast %cst_6 : f32 to vector<1x1x4xf32>
    %c0_7 = arith.constant 0 : index
    %c17 = arith.constant 17 : index
    %c0_8 = arith.constant 0 : index
    %5 = vector.load %arg9[%c0_7, %c17, %c0_8] : memref<1x18x4xf32, #tpu.memory_space<vmem>>, vector<1x1x4xf32>
    tpu.vector_store %arg9[%c0_7, %c17, %c0_8], %4 {strides = array<i32>} : memref<1x18x4xf32, #tpu.memory_space<vmem>>, vector<1x1x4xf32>,
    %cst_9 = arith.constant 0.000000e+00 : f32
    %6 = vector.broadcast %cst_9 : f32 to vector<1x1x32xf32>
    %c0_10 = arith.constant 0 : index
    %c17_11 = arith.constant 17 : index
    %c0_12 = arith.constant 0 : index
    %7 = vector.load %arg10[%c0_10, %c17_11, %c0_12] : memref<1x18x32xf32, #tpu.memory_space<vmem>>, vector<1x1x32xf32>
    tpu.vector_store %arg10[%c0_10, %c17_11, %c0_12], %6 {strides = array<i32>} : memref<1x18x32xf32, #tpu.memory_space<vmem>>, vector<1x1x32xf32>,
    %c0_13 = arith.constant 0 : index
    %c0_14 = arith.constant 0 : index
    %c0_15 = arith.constant 0 : index
    %8 = vector.load %arg1[%c0_13, %c0_14, %c0_15] : memref<1x4x16xf32, #tpu.memory_space<vmem>>, vector<1x4x16xf32>
    %9 = vector.shape_cast %8 : vector<1x4x16xf32> to vector<4x16xf32>
    %10 = tpu.transpose %9, [1, 0] : vector<4x16xf32> -> vector<16x4xf32>
    %c0_16 = arith.constant 0 : index
    %c1 = arith.constant 1 : index
    %c0_17 = arith.constant 0 : index
    %11 = vector.load %arg9[%c0_16, %c1, %c0_17] : memref<1x18x4xf32, #tpu.memory_space<vmem>>, vector<1x16x4xf32>
    %12 = vector.shape_cast %11 : vector<1x16x4xf32> to vector<16x4xf32>
    %13 = vector.shape_cast %10 : vector<16x4xf32> to vector<1x16x4xf32>
    tpu.vector_store %arg9[%c0_16, %c1, %c0_17], %13 {strides = array<i32>} : memref<1x18x4xf32, #tpu.memory_space<vmem>>, vector<1x16x4xf32>,
    %c0_18 = arith.constant 0 : index
    %c0_19 = arith.constant 0 : index
    %14 = vector.load %arg2[%c0_18, %c0_19] : memref<3x4xf32, #tpu.memory_space<vmem>>, vector<3x4xf32>
    %c0_20 = arith.constant 0 : index
    %c0_21 = arith.constant 0 : index
    %c0_22 = arith.constant 0 : index
    %15 = vector.load %arg9[%c0_20, %c0_21, %c0_22] : memref<1x18x4xf32, #tpu.memory_space<vmem>>, vector<1x16x4xf32>
    %16 = vector.extract_strided_slice %14 {offsets = [0, 0], sizes = [1, 4], strides = [1, 1]} : vector<3x4xf32> to vector<1x4xf32>
    %17 = vector.shape_cast %16 : vector<1x4xf32> to vector<1x1x4xf32>
    %18 = vector.broadcast %17 : vector<1x1x4xf32> to vector<1x16x4xf32>
    %19 = arith.mulf %15, %18 : vector<1x16x4xf32>
    %c0_23 = arith.constant 0 : index
    %c1_24 = arith.constant 1 : index
    %c0_25 = arith.constant 0 : index
    %20 = vector.load %arg9[%c0_23, %c1_24, %c0_25] : memref<1x18x4xf32, #tpu.memory_space<vmem>>, vector<1x16x4xf32>
    %21 = vector.extract_strided_slice %14 {offsets = [1, 0], sizes = [1, 4], strides = [1, 1]} : vector<3x4xf32> to vector<1x4xf32>
    %22 = vector.shape_cast %21 : vector<1x4xf32> to vector<1x1x4xf32>
    %23 = vector.broadcast %22 : vector<1x1x4xf32> to vector<1x16x4xf32>
    %24 = arith.mulf %20, %23 : vector<1x16x4xf32>
    %25 = arith.addf %19, %24 : vector<1x16x4xf32>
    %c0_26 = arith.constant 0 : index
    %c2 = arith.constant 2 : index
    %c0_27 = arith.constant 0 : index
    %26 = vector.load %arg9[%c0_26, %c2, %c0_27] : memref<1x18x4xf32, #tpu.memory_space<vmem>>, vector<1x16x4xf32>
    %27 = vector.extract_strided_slice %14 {offsets = [2, 0], sizes = [1, 4], strides = [1, 1]} : vector<3x4xf32> to vector<1x4xf32>
    %28 = vector.shape_cast %27 : vector<1x4xf32> to vector<1x1x4xf32>
    %29 = vector.broadcast %28 : vector<1x1x4xf32> to vector<1x16x4xf32>
    %30 = arith.mulf %26, %29 : vector<1x16x4xf32>
    %31 = arith.addf %25, %30 : vector<1x16x4xf32>
    %32 = vector.shape_cast %31 : vector<1x16x4xf32> to vector<16x4xf32>
    %c0_28 = arith.constant 0 : index
    %c0_29 = arith.constant 0 : index
    %33 = vector.load %arg3[%c0_28, %c0_29] : memref<4x32xf32, #tpu.memory_space<vmem>>, vector<4x32xf32>
    %cst_30 = arith.constant dense<0.000000e+00> : vector<16x32xf32>
    %34 = tpu.matmul %32, %33, %cst_30 {dimension_numbers = #tpu.dot_dimension_numbers<[1], [0], [0], [1], [0, 0, 1, 1], [], []>} : vector<16x4xf32>, vector<4x32xf32>, vector<16x32xf32> -> vector<16x32xf32>
    %c0_31 = arith.constant 0 : index
    %c0_32 = arith.constant 0 : index
    %35 = vector.load %arg4[%c0_31, %c0_32] : memref<1x32xf32, #tpu.memory_space<vmem>>, vector<1x32xf32>
    %36 = vector.broadcast %35 : vector<1x32xf32> to vector<16x32xf32>
    %37 = arith.addf %34, %36 : vector<16x32xf32>
    %cst_33 = arith.constant 0.000000e+00 : f32
    %38 = vector.broadcast %cst_33 : f32 to vector<16x32xf32>
    %39 = arith.maximumf %37, %38 : vector<16x32xf32>
    %c0_34 = arith.constant 0 : index
    %c1_35 = arith.constant 1 : index
    %c0_36 = arith.constant 0 : index
    %40 = vector.load %arg10[%c0_34, %c1_35, %c0_36] : memref<1x18x32xf32, #tpu.memory_space<vmem>>, vector<1x16x32xf32>
    %41 = vector.shape_cast %40 : vector<1x16x32xf32> to vector<16x32xf32>
    %42 = vector.shape_cast %39 : vector<16x32xf32> to vector<1x16x32xf32>
    tpu.vector_store %arg10[%c0_34, %c1_35, %c0_36], %42 {strides = array<i32>} : memref<1x18x32xf32, #tpu.memory_space<vmem>>, vector<1x16x32xf32>,
    %c0_37 = arith.constant 0 : index
    %c0_38 = arith.constant 0 : index
    %43 = vector.load %arg5[%c0_37, %c0_38] : memref<3x32xf32, #tpu.memory_space<vmem>>, vector<3x32xf32>
    %c0_39 = arith.constant 0 : index
    %c0_40 = arith.constant 0 : index
    %c0_41 = arith.constant 0 : index
    %44 = vector.load %arg10[%c0_39, %c0_40, %c0_41] : memref<1x18x32xf32, #tpu.memory_space<vmem>>, vector<1x16x32xf32>
    %45 = vector.extract_strided_slice %43 {offsets = [0, 0], sizes = [1, 32], strides = [1, 1]} : vector<3x32xf32> to vector<1x32xf32>
    %46 = vector.shape_cast %45 : vector<1x32xf32> to vector<1x1x32xf32>
    %47 = vector.broadcast %46 : vector<1x1x32xf32> to vector<1x16x32xf32>
    %48 = arith.mulf %44, %47 : vector<1x16x32xf32>
    %c0_42 = arith.constant 0 : index
    %c1_43 = arith.constant 1 : index
    %c0_44 = arith.constant 0 : index
    %49 = vector.load %arg10[%c0_42, %c1_43, %c0_44] : memref<1x18x32xf32, #tpu.memory_space<vmem>>, vector<1x16x32xf32>
    %50 = vector.extract_strided_slice %43 {offsets = [1, 0], sizes = [1, 32], strides = [1, 1]} : vector<3x32xf32> to vector<1x32xf32>
    %51 = vector.shape_cast %50 : vector<1x32xf32> to vector<1x1x32xf32>
    %52 = vector.broadcast %51 : vector<1x1x32xf32> to vector<1x16x32xf32>
    %53 = arith.mulf %49, %52 : vector<1x16x32xf32>
    %54 = arith.addf %48, %53 : vector<1x16x32xf32>
    %c0_45 = arith.constant 0 : index
    %c2_46 = arith.constant 2 : index
    %c0_47 = arith.constant 0 : index
    %55 = vector.load %arg10[%c0_45, %c2_46, %c0_47] : memref<1x18x32xf32, #tpu.memory_space<vmem>>, vector<1x16x32xf32>
    %56 = vector.extract_strided_slice %43 {offsets = [2, 0], sizes = [1, 32], strides = [1, 1]} : vector<3x32xf32> to vector<1x32xf32>
    %57 = vector.shape_cast %56 : vector<1x32xf32> to vector<1x1x32xf32>
    %58 = vector.broadcast %57 : vector<1x1x32xf32> to vector<1x16x32xf32>
    %59 = arith.mulf %55, %58 : vector<1x16x32xf32>
    %60 = arith.addf %54, %59 : vector<1x16x32xf32>
    %61 = vector.shape_cast %60 : vector<1x16x32xf32> to vector<16x32xf32>
    %c0_48 = arith.constant 0 : index
    %c0_49 = arith.constant 0 : index
    %62 = vector.load %arg6[%c0_48, %c0_49] : memref<32x32xf32, #tpu.memory_space<vmem>>, vector<32x32xf32>
    %cst_50 = arith.constant dense<0.000000e+00> : vector<16x32xf32>
    %63 = tpu.matmul %61, %62, %cst_50 {dimension_numbers = #tpu.dot_dimension_numbers<[1], [0], [0], [1], [0, 0, 1, 1], [], []>} : vector<16x32xf32>, vector<32x32xf32>, vector<16x32xf32> -> vector<16x32xf32>
    %c0_51 = arith.constant 0 : index
    %c0_52 = arith.constant 0 : index
    %64 = vector.load %arg7[%c0_51, %c0_52] : memref<1x32xf32, #tpu.memory_space<vmem>>, vector<1x32xf32>
    %65 = vector.broadcast %64 : vector<1x32xf32> to vector<16x32xf32>
    %66 = arith.addf %63, %65 : vector<16x32xf32>
    %cst_53 = arith.constant 0.000000e+00 : f32
    %67 = vector.broadcast %cst_53 : f32 to vector<16x32xf32>
    %68 = arith.maximumf %66, %67 : vector<16x32xf32>
    %c0_54 = arith.constant 0 : index
    %c1_55 = arith.constant 1 : index
    %c0_56 = arith.constant 0 : index
    %69 = vector.load %arg10[%c0_54, %c1_55, %c0_56] : memref<1x18x32xf32, #tpu.memory_space<vmem>>, vector<1x16x32xf32>
    %70 = vector.shape_cast %69 : vector<1x16x32xf32> to vector<16x32xf32>
    %71 = vector.shape_cast %68 : vector<16x32xf32> to vector<1x16x32xf32>
    tpu.vector_store %arg10[%c0_54, %c1_55, %c0_56], %71 {strides = array<i32>} : memref<1x18x32xf32, #tpu.memory_space<vmem>>, vector<1x16x32xf32>,
    %c0_i32 = arith.constant 0 : i32
    %c0_i32_57 = arith.constant 0 : i32
    %c0_i32_58 = arith.constant 0 : i32
    %72 = tpu.memref_slice %arg10[%c0_i32, %c0_i32_57, %c0_i32_58] : memref<1x18x32xf32, #tpu.memory_space<vmem>> -> memref<1x18x32xf32, #tpu.memory_space<vmem>>
    %73 = tpu.memref_squeeze %72 : memref<1x18x32xf32, #tpu.memory_space<vmem>> -> memref<18x32xf32, #tpu.memory_space<vmem>>
    %c1_59 = arith.constant 1 : index
    %c0_60 = arith.constant 0 : index
    %74 = tpu.strided_load %73[%c1_59, %c0_60] {strides = array<i32: 2, 1>} : memref<18x32xf32, #tpu.memory_space<vmem>>, vector<8x32xf32>
    %c0_i32_61 = arith.constant 0 : i32
    %c0_i32_62 = arith.constant 0 : i32
    %c0_i32_63 = arith.constant 0 : i32
    %75 = tpu.memref_slice %arg10[%c0_i32_61, %c0_i32_62, %c0_i32_63] : memref<1x18x32xf32, #tpu.memory_space<vmem>> -> memref<1x18x32xf32, #tpu.memory_space<vmem>>
    %76 = tpu.memref_squeeze %75 : memref<1x18x32xf32, #tpu.memory_space<vmem>> -> memref<18x32xf32, #tpu.memory_space<vmem>>
    %c2_64 = arith.constant 2 : index
    %c0_65 = arith.constant 0 : index
    %77 = tpu.strided_load %76[%c2_64, %c0_65] {strides = array<i32: 2, 1>} : memref<18x32xf32, #tpu.memory_space<vmem>>, vector<8x32xf32>
    %78 = arith.maximumf %74, %77 : vector<8x32xf32>
    %79 = tpu.transpose %78, [1, 0] : vector<8x32xf32> -> vector<32x8xf32>
    %c0_66 = arith.constant 0 : index
    %c0_67 = arith.constant 0 : index
    %c0_68 = arith.constant 0 : index
    %80 = vector.load %arg8[%c0_66, %c0_67, %c0_68] : memref<1x32x8xf32, #tpu.memory_space<vmem>>, vector<1x32x8xf32>
    %81 = vector.shape_cast %80 : vector<1x32x8xf32> to vector<32x8xf32>
    %82 = vector.shape_cast %79 : vector<32x8xf32> to vector<1x32x8xf32>
    tpu.vector_store %arg8[%c0_66, %c0_67, %c0_68], %82 {strides = array<i32>} : memref<1x32x8xf32, #tpu.memory_space<vmem>>, vector<1x32x8xf32>,
    return
  }
  func.func @transform_0(%arg0: i32) -> (i32, i32, i32) {
    %c0_i32 = arith.constant 0 : i32
    %c0_i32_0 = arith.constant 0 : i32
    %c0_i32_1 = arith.constant 0 : i32
    return %arg0, %c0_i32, %c0_i32_0 : i32, i32, i32
  }
  func.func @transform_1(%arg0: i32) -> (i32, i32) {
    %c0_i32 = arith.constant 0 : i32
    %c0_i32_0 = arith.constant 0 : i32
    %c0_i32_1 = arith.constant 0 : i32
    return %c0_i32, %c0_i32_0 : i32, i32
  }
  func.func @transform_2(%arg0: i32) -> (i32, i32) {
    %c0_i32 = arith.constant 0 : i32
    %c0_i32_0 = arith.constant 0 : i32
    %c0_i32_1 = arith.constant 0 : i32
    return %c0_i32, %c0_i32_0 : i32, i32
  }
  func.func @transform_3(%arg0: i32) -> (i32, i32) {
    %c0_i32 = arith.constant 0 : i32
    %c0_i32_0 = arith.constant 0 : i32
    %c0_i32_1 = arith.constant 0 : i32
    return %c0_i32, %c0_i32_0 : i32, i32
  }
  func.func @transform_4(%arg0: i32) -> (i32, i32) {
    %c0_i32 = arith.constant 0 : i32
    %c0_i32_0 = arith.constant 0 : i32
    %c0_i32_1 = arith.constant 0 : i32
    return %c0_i32, %c0_i32_0 : i32, i32
  }
  func.func @transform_5(%arg0: i32) -> (i32, i32) {
    %c0_i32 = arith.constant 0 : i32
    %c0_i32_0 = arith.constant 0 : i32
    %c0_i32_1 = arith.constant 0 : i32
    return %c0_i32, %c0_i32_0 : i32, i32
  }
  func.func @transform_6(%arg0: i32) -> (i32, i32) {
    %c0_i32 = arith.constant 0 : i32
    %c0_i32_0 = arith.constant 0 : i32
    %c0_i32_1 = arith.constant 0 : i32
    return %c0_i32, %c0_i32_0 : i32, i32
  }
  func.func @transform_7(%arg0: i32) -> (i32, i32, i32) {
    %c0_i32 = arith.constant 0 : i32
    %c0_i32_0 = arith.constant 0 : i32
    %c0_i32_1 = arith.constant 0 : i32
    return %arg0, %c0_i32, %c0_i32_0 : i32, i32, i32
  }
}

</mosaic_0001>

<llo_original>
// kernel: tpu_custom_call.1
$region0: #{tpu_custom_call.1}
  #allocation0 [shape = 'u32[]', space=smem, size = 0x4, offset = 0x4, fixed_abs, tag = 'smem constant byte address 0x4 - core index']
  #allocation1 [shape = 'u32[144,128]{1,0:T(1,128)}', space=vmem, size = 0x12000, scoped, tag = 'internal scratch']
  #allocation2 [shape = 'f32[1,18,4]{2,1,0:T(8,128)}', space=vmem, size = 0x3000, scoped, tag = 'scratch operand']
  #allocation3 [shape = 'f32[1,18,32]{2,1,0:T(8,128)}', space=vmem, size = 0x3000, scoped, tag = 'scratch operand']
  %s0 = inlined_call_operand.hbm [shape: f32[2,4,16], index: 0, kind: input, shape index: {}]
  %s1 = inlined_call_operand.hbm [shape: f32[3,4], index: 1, kind: input, shape index: {}]
  %s2 = inlined_call_operand.hbm [shape: f32[4,32], index: 2, kind: input, shape index: {}]
  %s3 = inlined_call_operand.vmem [shape: f32[1,32], index: 3, kind: input, shape index: {}]
  %s4 = inlined_call_operand.vmem [shape: f32[3,32], index: 4, kind: input, shape index: {}]
  %s5 = inlined_call_operand.hbm [shape: f32[32,32], index: 5, kind: input, shape index: {}]
  %s6 = inlined_call_operand.vmem [shape: f32[1,32], index: 6, kind: input, shape index: {}]
  %s7 = inlined_call_operand.vmem [shape: f32[2,32,8], index: 7, kind: output, shape index: {}]
  %s8 = sld [smem:[#allocation0]]
  $region77: #{tpu_custom_call.1} parent=0
    _
  %s10 = ssub.s32 1, %s8
  %s11 = scalar_select 0, %s10, %s8
  $region1: #{tpu_custom_call.1} parent=0
    #allocation4 [shape = 'u8[4096]{0}', space=vmem, size = 0x1000, scoped, tag = 'input window, operand 0']
    #allocation5 [shape = 's32[2]{0}', space=sflag, size = 0x8, scoped, tag = 'scoped memory for tpu_custom_call.1']
    #allocation6 [shape = 'u8[2048]{0}', space=vmem, size = 0x800, scoped, tag = 'input window, operand 1, single buffered']
    #allocation7 [shape = 's32[1]{0}', space=sflag, size = 0x4, scoped, tag = 'scoped memory for tpu_custom_call.1']
    #allocation8 [shape = 'u8[2048]{0}', space=vmem, size = 0x800, scoped, tag = 'input window, operand 2, single buffered']
    #allocation9 [shape = 'u8[16384]{0}', space=vmem, size = 0x4000, scoped, tag = 'input window, operand 5, single buffered']
    #allocation10 [shape = 's32[1]{0}', space=sflag, size = 0x4, scoped, tag = 'scoped memory for tpu_custom_call.1']
    %12 = vsyncpa [#allocation5], 0
    %s13 = scalar_lea.sflag [#allocation5], 1
    %14 = vsyncpa %s13, 0
    %15 = vsyncpa [#allocation7], 0
    %16 = vsyncpa [#allocation10], 0
    loop: start=0, step=1, limit=4
    $region2: #{tpu_custom_call.1} parent=1 // loop_pre_header
      _
    $region3: #{tpu_custom_call.1} parent=1 // loop_header
      %s18 = sphi 0, %s22
      %p19 = scmp.ge.s32.totalorder %s18, 4
      %s28 = sphi 0, %s30
      %s31 = sphi 0, %s28
      %s32 = sphi 0, %s31
      %s48 = sphi 0, %s32
      %s52 = sphi 0, %s52
      %s54 = sphi 0, %s52
      %s55 = sphi 0, %s54
      %s69 = sphi 0, %s55
      %s73 = sphi 0, %s73
      %s75 = sphi 0, %s73
      %s76 = sphi 0, %s75
      %s90 = sphi 0, %s76
      %s94 = sphi 0, %s94
      %s96 = sphi 0, %s94
      %s97 = sphi 0, %s96
      %s111 = sphi 0, %s97
      %s115 = sphi 0, %s115
      %s117 = sphi 0, %s115
      %s118 = sphi 0, %s117
      %s132 = sphi 0, %s118
      %s136 = sphi 0, %s136
      %s138 = sphi 0, %s136
      %s139 = sphi 0, %s138
      %s153 = sphi 0, %s139
      %s157 = sphi 0, %s157
      %s159 = sphi 0, %s157
      %s160 = sphi 0, %s159
      %s174 = sphi 0, %s160
      %s180 = sphi 0, %s182
      %s183 = sphi 0, %s180
      %s184 = sphi 0, %s183
      %s200 = sphi 0, %s184
    $region4: #{tpu_custom_call.1} parent=1 // loop_header_branch
      %21 = sbr.rel (%p19) target = $region8
    $region5: #{tpu_custom_call.1} parent=1 // loop_body
      %s23 = ssub.s32 %s18, 1
      %s24 = ssub.s32 %s18, 2
      %s25 = sadd.s32 %s18, 1
      %s26 = ssub.s32 %s18, %s25
      %p27 = scmp.eq.s32.totalorder %s26, 0
      %s29 = sadd.s32 %s28, 1
      %s30 = scalar_select %p27, %s28, %s29
      %p33 = pneg %p27
      %p34 = scmp.eq.s32.totalorder %s18, 1
      %p35 = por %p33, %p34
      %p36 = scmp.ne.s32.totalorder %s28, %s31
      %p37 = scmp.eq.s32.totalorder %s18, 0
      %p38 = por %p36, %p37
      %p39 = scmp.ne.s32.totalorder %s28, %s31
      %p40 = scmp.eq.s32.totalorder %s23, 1
      %p41 = por %p39, %p40
      %p42 = scmp.ne.s32.totalorder %s31, %s32
      %p43 = scmp.eq.s32.totalorder %s23, 0
      %p44 = por %p42, %p43
      %p45 = scmp.ne.s32.totalorder %s31, %s32
      %p46 = scmp.eq.s32.totalorder %s24, 1
      %p47 = por %p45, %p46
      %p49 = scmp.ne.s32.totalorder %s32, %s48
      %p50 = scmp.eq.s32.totalorder %s24, 0
      %p51 = por %p49, %p50
      %s53 = sadd.s32 %s52, 1
      %p56 = scmp.eq.s32.totalorder %s18, 1
      %p57 = scmp.ne.s32.totalorder %s52, %s54
      %p58 = scmp.eq.s32.totalorder %s18, 0
      %p59 = por %p57, %p58
      %p60 = scmp.ne.s32.totalorder %s52, %s54
      %p61 = scmp.eq.s32.totalorder %s23, 1
      %p62 = por %p60, %p61
      %p63 = scmp.ne.s32.totalorder %s54, %s55
      %p64 = scmp.eq.s32.totalorder %s23, 0
      %p65 = por %p63, %p64
      %p66 = scmp.ne.s32.totalorder %s54, %s55
      %p67 = scmp.eq.s32.totalorder %s24, 1
      %p68 = por %p66, %p67
      %p70 = scmp.ne.s32.totalorder %s55, %s69
      %p71 = scmp.eq.s32.totalorder %s24, 0
      %p72 = por %p70, %p71
      %s74 = sadd.s32 %s73, 1
      %p77 = scmp.eq.s32.totalorder %s18, 1
      %p78 = scmp.ne.s32.totalorder %s73, %s75
      %p79 = scmp.eq.s32.totalorder %s18, 0
      %p80 = por %p78, %p79
      %p81 = scmp.ne.s32.totalorder %s73, %s75
      %p82 = scmp.eq.s32.totalorder %s23, 1
      %p83 = por %p81, %p82
      %p84 = scmp.ne.s32.totalorder %s75, %s76
      %p85 = scmp.eq.s32.totalorder %s23, 0
      %p86 = por %p84, %p85
      %p87 = scmp.ne.s32.totalorder %s75, %s76
      %p88 = scmp.eq.s32.totalorder %s24, 1
      %p89 = por %p87, %p88
      %p91 = scmp.ne.s32.totalorder %s76, %s90
      %p92 = scmp.eq.s32.totalorder %s24, 0
      %p93 = por %p91, %p92
      %s95 = sadd.s32 %s94, 1
      %p98 = scmp.eq.s32.totalorder %s18, 1
      %p99 = scmp.ne.s32.totalorder %s94, %s96
      %p100 = scmp.eq.s32.totalorder %s18, 0
      %p101 = por %p99, %p100
      %p102 = scmp.ne.s32.totalorder %s94, %s96
      %p103 = scmp.eq.s32.totalorder %s23, 1
      %p104 = por %p102, %p103
      %p105 = scmp.ne.s32.totalorder %s96, %s97
      %p106 = scmp.eq.s32.totalorder %s23, 0
      %p107 = por %p105, %p106
      %p108 = scmp.ne.s32.totalorder %s96, %s97
      %p109 = scmp.eq.s32.totalorder %s24, 1
      %p110 = por %p108, %p109
      %p112 = scmp.ne.s32.totalorder %s97, %s111
      %p113 = scmp.eq.s32.totalorder %s24, 0
      %p114 = por %p112, %p113
      %s116 = sadd.s32 %s115, 1
      %p119 = scmp.eq.s32.totalorder %s18, 1
      %p120 = scmp.ne.s32.totalorder %s115, %s117
      %p121 = scmp.eq.s32.totalorder %s18, 0
      %p122 = por %p120, %p121
      %p123 = scmp.ne.s32.totalorder %s115, %s117
      %p124 = scmp.eq.s32.totalorder %s23, 1
      %p125 = por %p123, %p124
      %p126 = scmp.ne.s32.totalorder %s117, %s118
      %p127 = scmp.eq.s32.totalorder %s23, 0
      %p128 = por %p126, %p127
      %p129 = scmp.ne.s32.totalorder %s117, %s118
      %p130 = scmp.eq.s32.totalorder %s24, 1
      %p131 = por %p129, %p130
      %p133 = scmp.ne.s32.totalorder %s118, %s132
      %p134 = scmp.eq.s32.totalorder %s24, 0
      %p135 = por %p133, %p134
      %s137 = sadd.s32 %s136, 1
      %p140 = scmp.eq.s32.totalorder %s18, 1
      %p141 = scmp.ne.s32.totalorder %s136, %s138
      %p142 = scmp.eq.s32.totalorder %s18, 0
      %p143 = por %p141, %p142
      %p144 = scmp.ne.s32.totalorder %s136, %s138
      %p145 = scmp.eq.s32.totalorder %s23, 1
      %p146 = por %p144, %p145
      %p147 = scmp.ne.s32.totalorder %s138, %s139
      %p148 = scmp.eq.s32.totalorder %s23, 0
      %p149 = por %p147, %p148
      %p150 = scmp.ne.s32.totalorder %s138, %s139
      %p151 = scmp.eq.s32.totalorder %s24, 1
      %p152 = por %p150, %p151
      %p154 = scmp.ne.s32.totalorder %s139, %s153
      %p155 = scmp.eq.s32.totalorder %s24, 0
      %p156 = por %p154, %p155
      %s158 = sadd.s32 %s157, 1
      %p161 = scmp.eq.s32.totalorder %s18, 1
      %p162 = scmp.ne.s32.totalorder %s157, %s159
      %p163 = scmp.eq.s32.totalorder %s18, 0
      %p164 = por %p162, %p163
      %p165 = scmp.ne.s32.totalorder %s157, %s159
      %p166 = scmp.eq.s32.totalorder %s23, 1
      %p167 = por %p165, %p166
      %p168 = scmp.ne.s32.totalorder %s159, %s160
      %p169 = scmp.eq.s32.totalorder %s23, 0
      %p170 = por %p168, %p169
      %p171 = scmp.ne.s32.totalorder %s159, %s160
      %p172 = scmp.eq.s32.totalorder %s24, 1
      %p173 = por %p171, %p172
      %p175 = scmp.ne.s32.totalorder %s160, %s174
      %p176 = scmp.eq.s32.totalorder %s24, 0
      %p177 = por %p175, %p176
      %s178 = ssub.s32 %s18, %s25
      %p179 = scmp.eq.s32.totalorder %s178, 0
      %s181 = sadd.s32 %s180, 1
      %s182 = scalar_select %p179, %s180, %s181
      %p185 = pneg %p179
      %p186 = scmp.eq.s32.totalorder %s18, 1
      %p187 = por %p185, %p186
      %p188 = scmp.ne.s32.totalorder %s180, %s183
      %p189 = scmp.eq.s32.totalorder %s18, 0
      %p190 = por %p188, %p189
      %p191 = scmp.ne.s32.totalorder %s180, %s183
      %p192 = scmp.eq.s32.totalorder %s23, 1
      %p193 = por %p191, %p192
      %p194 = scmp.ne.s32.totalorder %s183, %s184
      %p195 = scmp.eq.s32.totalorder %s23, 0
      %p196 = por %p194, %p195
      %p197 = scmp.ne.s32.totalorder %s183, %s184
      %p198 = scmp.eq.s32.totalorder %s24, 1
      %p199 = por %p197, %p198
      %p201 = scmp.ne.s32.totalorder %s184, %s200
      %p202 = scmp.eq.s32.totalorder %s24, 0
      %p203 = por %p201, %p202
      %p204 = scmp.le.s32.totalorder 1, %s18
      %p205 = scmp.lt.s32.totalorder %s18, 3
      %p206 = pnand %p204, %p205
      %p207 = pneg %p206
      // Predicated region
      $region9: #{tpu_custom_call.1} parent=5 // pred_check
        _
      $region10: #{tpu_custom_call.1} parent=5 // pred_check_branch
        %209 = sbr.rel (%p206) target = $region12
      $region11: #{tpu_custom_call.1} parent=5 // pred_region
        %s210 = ssub.s32 %s18, 1
        // Predicated region
        $region13: #{tpu_custom_call.1} parent=11 // pred_check
          %p211 = pneg %p65
        $region14: #{tpu_custom_call.1} parent=11 // pred_check_branch
          %213 = sbr.rel (%p211) target = $region16
        $region15: #{tpu_custom_call.1} parent=11 // pred_region
          %s215 = ssub.s32 64, 64
          %216 = vsyncadd [#allocation7], %s215
          %s218 = sshll.u32 [#allocation6], 4
          %s219 = int_to_ptr.vmem [resolvable:$true] %s218
          %221 = dma.hbm_to_vmem [thread:$0]  %s1, 64, %s219, [#allocation7]
        $region16: #{tpu_custom_call.1} parent=11 // pred_fallthru
          _
        // Predicated region
        $region17: #{tpu_custom_call.1} parent=11 // pred_check
          %p222 = pneg %p86
        $region18: #{tpu_custom_call.1} parent=11 // pred_check_branch
          %224 = sbr.rel (%p222) target = $region20
        $region19: #{tpu_custom_call.1} parent=11 // pred_region
          %s226 = ssub.s32 64, 64
          %227 = vsyncadd [#allocation7], %s226
          %s229 = sshll.u32 [#allocation8], 4
          %s230 = int_to_ptr.vmem [resolvable:$true] %s229
          %232 = dma.hbm_to_vmem [thread:$0]  %s2, 64, %s230, [#allocation7]
        $region20: #{tpu_custom_call.1} parent=11 // pred_fallthru
          _
        // Predicated region
        $region21: #{tpu_custom_call.1} parent=11 // pred_check
          %p233 = pneg %p107
        $region22: #{tpu_custom_call.1} parent=11 // pred_check_branch
          %235 = sbr.rel (%p233) target = $region24
        $region23: #{tpu_custom_call.1} parent=11 // pred_region
          _
        $region24: #{tpu_custom_call.1} parent=11 // pred_fallthru
          _
        // Predicated region
        $region25: #{tpu_custom_call.1} parent=11 // pred_check
          %p236 = pneg %p128
        $region26: #{tpu_custom_call.1} parent=11 // pred_check_branch
          %238 = sbr.rel (%p236) target = $region28
        $region27: #{tpu_custom_call.1} parent=11 // pred_region
          _
        $region28: #{tpu_custom_call.1} parent=11 // pred_fallthru
          _
        // Predicated region
        $region29: #{tpu_custom_call.1} parent=11 // pred_check
          %p239 = pneg %p149
        $region30: #{tpu_custom_call.1} parent=11 // pred_check_branch
          %241 = sbr.rel (%p239) target = $region32
        $region31: #{tpu_custom_call.1} parent=11 // pred_region
          %s243 = ssub.s32 512, 512
          %244 = vsyncadd [#allocation10], %s243
          %s245 = sshll.u32 [#allocation9], 4
          %s246 = int_to_ptr.vmem [resolvable:$true] %s245
          %251 = dma.hbm_to_vmem [thread:$0]  %s5, 512, %s246, [#allocation10], 128, 128, 8
        $region32: #{tpu_custom_call.1} parent=11 // pred_fallthru
          _
        // Predicated region
        $region33: #{tpu_custom_call.1} parent=11 // pred_check
          %p252 = pneg %p170
        $region34: #{tpu_custom_call.1} parent=11 // pred_check_branch
          %254 = sbr.rel (%p252) target = $region36
        $region35: #{tpu_custom_call.1} parent=11 // pred_region
          _
        $region36: #{tpu_custom_call.1} parent=11 // pred_fallthru
          _
      $region12: #{tpu_custom_call.1} parent=5 // pred_fallthru
        _
      %p255 = scmp.lt.s32.totalorder %s18, 2
      // Predicated region
      $region37: #{tpu_custom_call.1} parent=5 // pred_check
        %p256 = pneg %p255
      $region38: #{tpu_custom_call.1} parent=5 // pred_check_branch
        %258 = sbr.rel (%p256) target = $region40
      $region39: #{tpu_custom_call.1} parent=5 // pred_region
        // Predicated region
        $region41: #{tpu_custom_call.1} parent=39 // pred_check
          %p259 = pneg %p38
        $region42: #{tpu_custom_call.1} parent=39 // pred_check_branch
          %261 = sbr.rel (%p259) target = $region44
        $region43: #{tpu_custom_call.1} parent=39 // pred_region
          %s262 = sand.u32 %s28, 1
          %s263 = scalar_lea.sflag [#allocation5], %s262
          %s264 = sand.u32 %s28, 1
          %s265 = smul.addr %s264, 4
          %s266 = scalar_lea.vmem [#allocation4], %s265
          %s268 = ssub.s32 64, 64
          %269 = vsyncadd %s263, %s268
          %s270 = smul.addr %s18, 64
          %s271 = scalar_lea.hbm %s0, %s270
          %s273 = sshll.u32 %s266, 4
          %s274 = int_to_ptr.vmem [resolvable:$true] %s273
          %276 = dma.hbm_to_vmem [thread:$0]  %s271, 64, %s274, %s263
        $region44: #{tpu_custom_call.1} parent=39 // pred_fallthru
          _
      $region40: #{tpu_custom_call.1} parent=5 // pred_fallthru
        _
      %p277 = scmp.le.s32.totalorder 1, %s18
      %p278 = scmp.lt.s32.totalorder %s18, 3
      %p279 = pnand %p277, %p278
      %p280 = pneg %p279
      // Predicated region
      $region45: #{tpu_custom_call.1} parent=5 // pred_check
        _
      $region46: #{tpu_custom_call.1} parent=5 // pred_check_branch
        %282 = sbr.rel (%p279) target = $region48
      $region47: #{tpu_custom_call.1} parent=5 // pred_region
        %s283 = ssub.s32 %s18, 1
        %s284 = sand.u32 %s31, 1
        %s285 = scalar_lea.sflag [#allocation5], %s284
        %s286 = sand.u32 %s31, 1
        %s287 = smul.addr %s286, 4
        %s288 = scalar_lea.vmem [#allocation4], %s287
        // Predicated region
        $region49: #{tpu_custom_call.1} parent=47 // pred_check
          %p289 = pneg %p44
        $region50: #{tpu_custom_call.1} parent=47 // pred_check_branch
          %291 = sbr.rel (%p289) target = $region52
        $region51: #{tpu_custom_call.1} parent=47 // pred_region
          %292 = dma.done %s285, 64
        $region52: #{tpu_custom_call.1} parent=47 // pred_fallthru
          _
        // Predicated region
        $region53: #{tpu_custom_call.1} parent=47 // pred_check
          %p293 = pneg %p65
        $region54: #{tpu_custom_call.1} parent=47 // pred_check_branch
          %295 = sbr.rel (%p293) target = $region56
        $region55: #{tpu_custom_call.1} parent=47 // pred_region
          %296 = dma.done [#allocation7], 64
        $region56: #{tpu_custom_call.1} parent=47 // pred_fallthru
          _
        // Predicated region
        $region57: #{tpu_custom_call.1} parent=47 // pred_check
          %p297 = pneg %p86
        $region58: #{tpu_custom_call.1} parent=47 // pred_check_branch
          %299 = sbr.rel (%p297) target = $region60
        $region59: #{tpu_custom_call.1} parent=47 // pred_region
          %300 = dma.done [#allocation7], 64
        $region60: #{tpu_custom_call.1} parent=47 // pred_fallthru
          _
        // Predicated region
        $region61: #{tpu_custom_call.1} parent=47 // pred_check
          %p301 = pneg %p149
        $region62: #{tpu_custom_call.1} parent=47 // pred_check_branch
          %303 = sbr.rel (%p301) target = $region64
        $region63: #{tpu_custom_call.1} parent=47 // pred_region
          %304 = dma.done [#allocation10], 512
        $region64: #{tpu_custom_call.1} parent=47 // pred_fallthru
          _
        %s305 = sand.u32 %s31, 1
        %s306 = scalar_lea.sflag [#allocation5], %s305
        %s307 = sand.u32 %s31, 1
        %s308 = smul.addr %s307, 4
        %s309 = scalar_lea.vmem [#allocation4], %s308
        %p310 = pneg %p44
        %p311 = pneg %p41
        %p312 = pneg %p65
        %p313 = pneg %p62
        %p314 = pneg %p86
        %p315 = pneg %p83
        %p316 = pneg %p107
        %p317 = pneg %p104
        %p318 = pneg %p128
        %p319 = pneg %p125
        %p320 = pneg %p149
        %p321 = pneg %p146
        %p322 = pneg %p170
        %p323 = pneg %p167
        %p324 = pneg %p196
        %p325 = pneg %p193
        %p326 = scmp.lt.s32.totalorder %s23, 1
        %s327 = scalar_select %p326, %s23, 1
        %s328 = smul.addr %s327, 4
        %s329 = smul.addr %s328, 8
        %s330 = scalar_lea.vmem %s7, %s329
        %p331 = scmp.lt.s32.totalorder %s23, 1
        %s332 = scalar_select %p331, %s23, 1
        %s333 = smul.addr %s332, 4
        %s334 = smul.addr %s333, 8
        %s335 = scalar_lea.vmem %s7, %s334
        %vm336 = vcmask 24576
        %337 = vst.msk [vmem:[#allocation2] sm:$0x1] %vm336, 0.0
        %vm338 = vcmask 253952
        %339 = vst.msk [vmem:[#allocation3] sm:$0x1] %vm338, 0.0
        %340 = vst.msk [vmem:[#allocation2 + $0x11] sm:$0x1] %vm336, 0.0
        %341 = vst.msk [vmem:[#allocation3 + $0x11] sm:$0x1] %vm338, 0.0
        %v342 = vld [vmem:[%s288] sm:$0xf]
        %343 = vxpose.xlu0.b32.start [1/16] %v342, 128
        %344 = vxpose.xlu0.b32.cont [2/16] 0.0, 128
        %345 = vxpose.xlu0.b32.cont [3/16] 0.0, 128
        %346 = vxpose.xlu0.b32.cont [4/16] 0.0, 128
        %347 = vxpose.xlu0.b32.cont [5/16] 0.0, 128
        %348 = vxpose.xlu0.b32.cont [6/16] 0.0, 128
        %349 = vxpose.xlu0.b32.cont [7/16] 0.0, 128
        %350 = vxpose.xlu0.b32.cont [8/16] 0.0, 128
        %351 = vxpose.xlu0.b32.cont [9/16] 0.0, 128
        %352 = vxpose.xlu0.b32.cont [10/16] 0.0, 128
        %353 = vxpose.xlu0.b32.cont [11/16] 0.0, 128
        %354 = vxpose.xlu0.b32.cont [12/16] 0.0, 128
        %355 = vxpose.xlu0.b32.cont [13/16] 0.0, 128
        %356 = vxpose.xlu0.b32.cont [14/16] 0.0, 128
        %357 = vxpose.xlu0.b32.cont [15/16] 0.0, 128
        %358 = vxpose.xlu0.b32.end [16/16] 0.0, 128
        %v359 = vpop.trf.xlu0
        %v360 = vpop.trf.xlu0
        %v361 = vpop.trf.xlu0
        %v362 = vpop.trf.xlu0
        %v363 = vpop.trf.xlu0
        %v364 = vpop.trf.xlu0
        %v365 = vpop.trf.xlu0
        %v366 = vpop.trf.xlu0
        %v367 = vpop.trf.xlu0
        %v368 = vpop.trf.xlu0
        %v369 = vpop.trf.xlu0
        %v370 = vpop.trf.xlu0
        %v371 = vpop.trf.xlu0
        %v372 = vpop.trf.xlu0
        %v373 = vpop.trf.xlu0
        %v374 = vpop.trf.xlu0
        %vm375 = vcmask 31744
        %376 = vst.msk [vmem:[#allocation2 + $0x1] sm:$0xff] %vm375, %v359
        %377 = vst.msk [vmem:[#allocation2 + $0x9] sm:$0xff] %vm375, %v360
        %v378 = vld [vmem:[#allocation6] sm:$0x7]
        %v379 = vld [vmem:[#allocation2] sm:$0xff]
        %v380 = vld [vmem:[#allocation2 + $0x8] sm:$0xff]
        %v381 = vlaneseq
        %v382 = vshrl.u32 %v381, 7
        %v383 = vsub.s32 0, %v382
        %v384 = vrot.slane %v378, %v383
        %v385 = vmul.f32 %v379, %v384
        %v386 = vmul.f32 %v380, %v384
        %v387 = vld [vmem:[#allocation2 + $0x1] sm:$0xff]
        %v388 = vld [vmem:[#allocation2 + $0x9] sm:$0xff]
        %v389 = vlaneseq
        %v390 = vshrl.u32 %v389, 7
        %v391 = vsub.s32 1, %v390
        %v392 = vrot.slane %v378, %v391
        %v393 = vmul.f32 %v387, %v392
        %v394 = vmul.f32 %v388, %v392
        %v395 = vadd.f32 %v385, %v393
        %v396 = vadd.f32 %v386, %v394
        %v397 = vld [vmem:[#allocation2 + $0x2] sm:$0xff]
        %v398 = vld [vmem:[#allocation2 + $0xa] sm:$0xff]
        %v399 = vlaneseq
        %v400 = vshrl.u32 %v399, 7
        %v401 = vsub.s32 2, %v400
        %v402 = vrot.slane %v378, %v401
        %v403 = vmul.f32 %v397, %v402
        %v404 = vmul.f32 %v398, %v402
        %v405 = vadd.f32 %v395, %v403
        %v406 = vadd.f32 %v396, %v404
        %v407 = vld [vmem:[#allocation8] sm:$0xf]
        %v408 = vld [vmem:[%s3] sm:$0x1]
        %v410 = vlaneseq
        %v411 = vshrl.u32 %v410, 7
        %v412 = vsub.s32 0, %v411
        %v413 = vrot.slane %v408, %v412
        %v416 = vsel %vm375, %v405, 0
        %v419 = vsel %vm375, %v406, 0
        %vm421 = vcmask 1043456
        %v423 = vsel %vm421, %v407, 0
        %425 = vmatprep.subr.mxu0 0.0
        %426 = vmatpush1.msra.mxu0 0.0
        %427 = vmatprep.subr.mxu0 0.0
        %428 = vmatpush1.msra.mxu0 0.0
        %429 = vmatprep.subr.mxu0 0.0
        %430 = vmatpush1.msra.mxu0 0.0
        %431 = vmatprep.subr.mxu0 0.0
        %432 = vmatpush1.msra.mxu0 0.0
        %433 = vmatprep.subr.mxu0 0.0
        %434 = vmatpush1.msra.mxu0 0.0
        %435 = vmatprep.subr.mxu0 0.0
        %436 = vmatpush1.msra.mxu0 0.0
        %437 = vmatprep.subr.mxu0 0.0
        %438 = vmatpush1.msra.mxu0 0.0
        %439 = vmatprep.subr.mxu0 0.0
        %440 = vmatpush1.msra.mxu0 0.0
        %441 = vmatprep.subr.mxu0 0.0
        %442 = vmatpush1.msra.mxu0 0.0
        %443 = vmatprep.subr.mxu0 0.0
        %444 = vmatpush1.msra.mxu0 0.0
        %445 = vmatprep.subr.mxu0 0.0
        %446 = vmatpush1.msra.mxu0 0.0
        %447 = vmatprep.subr.mxu0 0.0
        %448 = vmatpush1.msra.mxu0 0.0
        %449 = vmatprep.subr.mxu0 0.0
        %450 = vmatpush1.msra.mxu0 0.0
        %451 = vmatprep.subr.mxu0 0.0
        %452 = vmatpush1.msra.mxu0 0.0
        %453 = vmatprep.subr.mxu0 0.0
        %454 = vmatpush1.msra.mxu0 0.0
        %455 = vmatprep.subr.mxu0 0.0
        %456 = vmatpush1.msra.mxu0 %v423
        %457 = vmatprep.subr.mxu0 0.0
        %458 = vmatpush2.msra.mxu0 0.0
        %459 = vmatprep.subr.mxu0 0.0
        %460 = vmatpush2.msra.mxu0 0.0
        %461 = vmatprep.subr.mxu0 0.0
        %462 = vmatpush2.msra.mxu0 0.0
        %463 = vmatprep.subr.mxu0 0.0
        %464 = vmatpush2.msra.mxu0 0.0
        %465 = vmatprep.subr.mxu0 0.0
        %466 = vmatpush2.msra.mxu0 0.0
        %467 = vmatprep.subr.mxu0 0.0
        %468 = vmatpush2.msra.mxu0 0.0
        %469 = vmatprep.subr.mxu0 0.0
        %470 = vmatpush2.msra.mxu0 0.0
        %471 = vmatprep.subr.mxu0 0.0
        %472 = vmatpush2.msra.mxu0 0.0
        %473 = vmatprep.subr.mxu0 0.0
        %474 = vmatpush2.msra.mxu0 0.0
        %475 = vmatprep.subr.mxu0 0.0
        %476 = vmatpush2.msra.mxu0 0.0
        %477 = vmatprep.subr.mxu0 0.0
        %478 = vmatpush2.msra.mxu0 0.0
        %479 = vmatprep.subr.mxu0 0.0
        %480 = vmatpush2.msra.mxu0 0.0
        %481 = vmatprep.subr.mxu0 0.0
        %482 = vmatpush2.msra.mxu0 0.0
        %483 = vmatprep.subr.mxu0 0.0
        %484 = vmatpush2.msra.mxu0 0.0
        %485 = vmatprep.subr.mxu0 0.0
        %486 = vmatpush2.msra.mxu0 0.0
        %487 = vmatprep.subr.mxu0 0.0
        %488 = vmatpush2.msra.mxu0 0.0
        %489 = vmatprep.mubr.f32.mxu0 0.0
        %490 = vmatmul.mubr.f32.gmra.mxu0 %v416
        %v491 = vpop.f32.mrf.mxu0
        %v492 = vadd.f32 %v413, %v491
        %v493 = vpop.f32.mrf.mxu0
        %494 = vmatprep.mubr.f32.mxu0 0.0
        %495 = vmatmul.mubr.f32.gmra.mxu0 %v419
        %v496 = vpop.f32.mrf.mxu0
        %v497 = vadd.f32 %v413, %v496
        %v498 = vpop.f32.mrf.mxu0
        %499 = vdwg.mxu0
        %v500 = vmax.f32 %v492, 0.0
        %v501 = vmax.f32 %v497, 0.0
        %vm502 = vcmask 261120
        %503 = vst.msk [vmem:[#allocation3 + $0x1] sm:$0xff] %vm502, %v500
        %504 = vst.msk [vmem:[#allocation3 + $0x9] sm:$0xff] %vm502, %v501
        %v505 = vld [vmem:[%s4] sm:$0x7]
        %v506 = vld [vmem:[#allocation3] sm:$0xff]
        %v507 = vld [vmem:[#allocation3 + $0x8] sm:$0xff]
        %v508 = vlaneseq
        %v509 = vshrl.u32 %v508, 7
        %v510 = vsub.s32 0, %v509
        %v511 = vrot.slane %v505, %v510
        %v512 = vmul.f32 %v506, %v511
        %v513 = vmul.f32 %v507, %v511
        %v514 = vld [vmem:[#allocation3 + $0x1] sm:$0xff]
        %v515 = vld [vmem:[#allocation3 + $0x9] sm:$0xff]
        %v516 = vlaneseq
        %v517 = vshrl.u32 %v516, 7
        %v518 = vsub.s32 1, %v517
        %v519 = vrot.slane %v505, %v518
        %v520 = vmul.f32 %v514, %v519
        %v521 = vmul.f32 %v515, %v519
        %v522 = vadd.f32 %v512, %v520
        %v523 = vadd.f32 %v513, %v521
        %v524 = vld [vmem:[#allocation3 + $0x2] sm:$0xff]
        %v525 = vld [vmem:[#allocation3 + $0xa] sm:$0xff]
        %v526 = vlaneseq
        %v527 = vshrl.u32 %v526, 7
        %v528 = vsub.s32 2, %v527
        %v529 = vrot.slane %v505, %v528
        %v530 = vmul.f32 %v524, %v529
        %v531 = vmul.f32 %v525, %v529
        %v532 = vadd.f32 %v522, %v530
        %v533 = vadd.f32 %v523, %v531
        %v534 = vld [vmem:[#allocation9] sm:$0xff]
        %v535 = vld [vmem:[#allocation9 + $0x8] sm:$0xff]
        %v536 = vld [vmem:[#allocation9 + $0x10] sm:$0xff]
        %v537 = vld [vmem:[#allocation9 + $0x18] sm:$0xff]
        %v538 = vld [vmem:[%s6] sm:$0x1]
        %v540 = vlaneseq
        %v541 = vshrl.u32 %v540, 7
        %v542 = vsub.s32 0, %v541
        %v543 = vrot.slane %v538, %v542
        %v546 = vsel %vm502, %v532, 0
        %v549 = vsel %vm502, %v533, 0
        %551 = vmatprep.subr.mxu0 0.0
        %552 = vmatpush1.msra.mxu0 0.0
        %553 = vmatprep.subr.mxu0 0.0
        %554 = vmatpush1.msra.mxu0 0.0
        %555 = vmatprep.subr.mxu0 0.0
        %556 = vmatpush1.msra.mxu0 0.0
        %557 = vmatprep.subr.mxu0 0.0
        %558 = vmatpush1.msra.mxu0 0.0
        %559 = vmatprep.subr.mxu0 0.0
        %560 = vmatpush1.msra.mxu0 0.0
        %561 = vmatprep.subr.mxu0 0.0
        %562 = vmatpush1.msra.mxu0 0.0
        %563 = vmatprep.subr.mxu0 0.0
        %564 = vmatpush1.msra.mxu0 0.0
        %565 = vmatprep.subr.mxu0 0.0
        %566 = vmatpush1.msra.mxu0 0.0
        %567 = vmatprep.subr.mxu0 0.0
        %568 = vmatpush1.msra.mxu0 0.0
        %569 = vmatprep.subr.mxu0 0.0
        %570 = vmatpush1.msra.mxu0 0.0
        %571 = vmatprep.subr.mxu0 0.0
        %572 = vmatpush1.msra.mxu0 0.0
        %573 = vmatprep.subr.mxu0 0.0
        %574 = vmatpush1.msra.mxu0 0.0
        %575 = vmatprep.subr.mxu0 0.0
        %576 = vmatpush1.msra.mxu0 %v537
        %577 = vmatprep.subr.mxu0 0.0
        %578 = vmatpush1.msra.mxu0 %v536
        %579 = vmatprep.subr.mxu0 0.0
        %580 = vmatpush1.msra.mxu0 %v535
        %581 = vmatprep.subr.mxu0 0.0
        %582 = vmatpush1.msra.mxu0 %v534
        %583 = vmatprep.subr.mxu0 0.0
        %584 = vmatpush2.msra.mxu0 0.0
        %585 = vmatprep.subr.mxu0 0.0
        %586 = vmatpush2.msra.mxu0 0.0
        %587 = vmatprep.subr.mxu0 0.0
        %588 = vmatpush2.msra.mxu0 0.0
        %589 = vmatprep.subr.mxu0 0.0
        %590 = vmatpush2.msra.mxu0 0.0
        %591 = vmatprep.subr.mxu0 0.0
        %592 = vmatpush2.msra.mxu0 0.0
        %593 = vmatprep.subr.mxu0 0.0
        %594 = vmatpush2.msra.mxu0 0.0
        %595 = vmatprep.subr.mxu0 0.0
        %596 = vmatpush2.msra.mxu0 0.0
        %597 = vmatprep.subr.mxu0 0.0
        %598 = vmatpush2.msra.mxu0 0.0
        %599 = vmatprep.subr.mxu0 0.0
        %600 = vmatpush2.msra.mxu0 0.0
        %601 = vmatprep.subr.mxu0 0.0
        %602 = vmatpush2.msra.mxu0 0.0
        %603 = vmatprep.subr.mxu0 0.0
        %604 = vmatpush2.msra.mxu0 0.0
        %605 = vmatprep.subr.mxu0 0.0
        %606 = vmatpush2.msra.mxu0 0.0
        %607 = vmatprep.subr.mxu0 0.0
        %608 = vmatpush2.msra.mxu0 0.0
        %609 = vmatprep.subr.mxu0 0.0
        %610 = vmatpush2.msra.mxu0 0.0
        %611 = vmatprep.subr.mxu0 0.0
        %612 = vmatpush2.msra.mxu0 0.0
        %613 = vmatprep.subr.mxu0 0.0
        %614 = vmatpush2.msra.mxu0 0.0
        %615 = vmatprep.mubr.f32.mxu0 0.0
        %616 = vmatmul.mubr.f32.gmra.mxu0 %v546
        %v617 = vpop.f32.mrf.mxu0
        %v618 = vadd.f32 %v543, %v617
        %v619 = vpop.f32.mrf.mxu0
        %620 = vmatprep.mubr.f32.mxu0 0.0
        %621 = vmatmul.mubr.f32.gmra.mxu0 %v549
        %v622 = vpop.f32.mrf.mxu0
        %v623 = vadd.f32 %v543, %v622
        %v624 = vpop.f32.mrf.mxu0
        %625 = vdwg.mxu0
        %v626 = vmax.f32 %v618, 0.0
        %v627 = vmax.f32 %v623, 0.0
        %628 = vst.msk [vmem:[#allocation3 + $0x1] sm:$0xff] %vm502, %v626
        %629 = vst.msk [vmem:[#allocation3 + $0x9] sm:$0xff] %vm502, %v627
        %s630 = scalar_lea.vmem [#allocation3], 1
        %v631 = vld [vmem:[%s630] ss:$2 sm:$0xff]
        %s632 = scalar_lea.vmem [#allocation3], 2
        %v633 = vld [vmem:[%s632] ss:$2 sm:$0xff]
        %v634 = vmax.f32 %v631, %v633
        %635 = vxpose.xlu0.b32.start [1/16] %v634, 128
        %636 = vxpose.xlu0.b32.cont [2/16] 0.0, 128
        %637 = vxpose.xlu0.b32.cont [3/16] 0.0, 128
        %638 = vxpose.xlu0.b32.cont [4/16] 0.0, 128
        %639 = vxpose.xlu0.b32.cont [5/16] 0.0, 128
        %640 = vxpose.xlu0.b32.cont [6/16] 0.0, 128
        %641 = vxpose.xlu0.b32.cont [7/16] 0.0, 128
        %642 = vxpose.xlu0.b32.cont [8/16] 0.0, 128
        %643 = vxpose.xlu0.b32.cont [9/16] 0.0, 128
        %644 = vxpose.xlu0.b32.cont [10/16] 0.0, 128
        %645 = vxpose.xlu0.b32.cont [11/16] 0.0, 128
        %646 = vxpose.xlu0.b32.cont [12/16] 0.0, 128
        %647 = vxpose.xlu0.b32.cont [13/16] 0.0, 128
        %648 = vxpose.xlu0.b32.cont [14/16] 0.0, 128
        %649 = vxpose.xlu0.b32.cont [15/16] 0.0, 128
        %650 = vxpose.xlu0.b32.end [16/16] 0.0, 128
        %v651 = vpop.trf.xlu0
        %v652 = vpop.trf.xlu0
        %v653 = vpop.trf.xlu0
        %v654 = vpop.trf.xlu0
        %v655 = vpop.trf.xlu0
        %v656 = vpop.trf.xlu0
        %v657 = vpop.trf.xlu0
        %v658 = vpop.trf.xlu0
        %v659 = vpop.trf.xlu0
        %v660 = vpop.trf.xlu0
        %v661 = vpop.trf.xlu0
        %v662 = vpop.trf.xlu0
        %v663 = vpop.trf.xlu0
        %v664 = vpop.trf.xlu0
        %v665 = vpop.trf.xlu0
        %v666 = vpop.trf.xlu0
        %vm667 = vcmask 64512
        %668 = vst.msk [vmem:[%s335] sm:$0xff] %vm667, %v651
        %669 = vst.msk [vmem:[%s335 + $0x8] sm:$0xff] %vm667, %v652
        %670 = vst.msk [vmem:[%s335 + $0x10] sm:$0xff] %vm667, %v653
        %671 = vst.msk [vmem:[%s335 + $0x18] sm:$0xff] %vm667, %v654
        %p672 = scmp.lt.s32.totalorder %s23, 1
        %s673 = scalar_select %p672, %s23, 1
        %s674 = smul.addr %s673, 4
        %s675 = smul.addr %s674, 8
        %s676 = scalar_lea.vmem %s7, %s675
        // Predicated region
        $region65: #{tpu_custom_call.1} parent=47 // pred_check
          %p677 = pneg %p193
        $region66: #{tpu_custom_call.1} parent=47 // pred_check_branch
          %679 = sbr.rel (%p677) target = $region68
        $region67: #{tpu_custom_call.1} parent=47 // pred_region
          _
        $region68: #{tpu_custom_call.1} parent=47 // pred_fallthru
          _
      $region48: #{tpu_custom_call.1} parent=5 // pred_fallthru
        _
      %p680 = scmp.le.s32.totalorder 2, %s18
      // Predicated region
      $region69: #{tpu_custom_call.1} parent=5 // pred_check
        %p681 = pneg %p680
      $region70: #{tpu_custom_call.1} parent=5 // pred_check_branch
        %683 = sbr.rel (%p681) target = $region72
      $region71: #{tpu_custom_call.1} parent=5 // pred_region
        %s684 = ssub.s32 %s18, 2
        // Predicated region
        $region73: #{tpu_custom_call.1} parent=71 // pred_check
          %p685 = pneg %p199
        $region74: #{tpu_custom_call.1} parent=71 // pred_check_branch
          %687 = sbr.rel (%p685) target = $region76
        $region75: #{tpu_custom_call.1} parent=71 // pred_region
          %p688 = scmp.lt.s32.totalorder %s24, 1
          %s689 = scalar_select %p688, %s24, 1
          %s690 = smul.addr %s689, 4
          %s691 = smul.addr %s690, 8
          %s692 = scalar_lea.vmem %s7, %s691
        $region76: #{tpu_custom_call.1} parent=71 // pred_fallthru
          _
      $region72: #{tpu_custom_call.1} parent=5 // pred_fallthru
        _
    $region6: #{tpu_custom_call.1} parent=1 // loop_footer
      %s22 = sadd.s32 1, %s18
    $region7: #{tpu_custom_call.1} parent=1 // loop_footer_branch
      %17 = sbr.rel target = $region3
    $region8: #{tpu_custom_call.1} parent=1 // loop_exit
      _
    %693 = vsyncpa [#allocation5], 1
    %s694 = scalar_lea.sflag [#allocation5], 1
    %695 = vsyncpa %s694, 1
    %696 = vsyncpa [#allocation7], 1
    %697 = vsyncpa [#allocation10], 1

</llo_original>
